<compile_context>
chip_gen: v5e
topology: v5e:2x2
jax: 0.10.0
libtpu: 0.0.40
codegen_flags: <defaults>
</compile_context>

<pallas_src>
import functools
import math

import jax
import jax.numpy as jnp
from jax.experimental import pallas as pl
from jax.experimental.pallas import tpu as pltpu


def _rmsnorm_kernel(x_ref, w_ref, o_ref, *, eps, input_dtype):
    """Normalize one (block_rows, hidden) tile.

    x_ref: (block_rows, hidden) input tile (any float dtype)
    w_ref: (1, hidden) weight, pre-cast to the output dtype, kept resident
    o_ref: (block_rows, hidden) output tile in result_type(weight, x)
    """
    x = x_ref[...].astype(jnp.float32)
    var = jnp.mean(x * x, axis=-1, keepdims=True)
    inv = jax.lax.rsqrt(var + eps)
    # Faithful to PyTorch: cast back to the input dtype BEFORE the weight
    # multiply, then the multiply promotes to the output dtype.
    normed = (x * inv).astype(input_dtype)
    o_ref[...] = w_ref[...] * normed.astype(o_ref.dtype)


def _vmem_limit_bytes():
    """Generation-aware scoped-VMEM limit (v7x has 64 MiB/TC; v5e/v6e 128 MiB)."""
    try:
        cap = int(pltpu.get_tpu_info().vmem_capacity_bytes)
    except Exception:  # pragma: no cover - be robust if the query is unavailable
        cap = 128 << 20
    return min(64 << 20, max(16 << 20, cap // 2))


def _pick_block_rows(rows, hidden, in_itemsize, out_itemsize, vmem_limit):
    """Fixed-target row tile (512) bounded by a real VMEM working-set estimate.

    Working set per grid step ~= 2*(in tile) + 2*(out tile)   [double buffering]
                                + ~2 f32 intermediates of the tile.
    Also guarantees >= 2 grid steps (when rows > 8) so the 'parallel' axis can
    be split across both TensorCores on v7x.
    """
    if rows <= 8:
        return max(rows, 1)  # block == full (small) extent; always legal
    budget = (vmem_limit * 3) // 4  # leave headroom inside the scoped limit
    per_row = hidden * (2 * in_itemsize + 2 * out_itemsize + 2 * 4)
    cap = max(8, (budget // per_row) // 8 * 8)
    block = min(512, cap)
    # Force at least 2 grid steps: block_rows <= round_up(ceil(rows/2), 8) < rows.
    half = ((rows + 1) // 2 + 7) // 8 * 8
    block = min(block, half)
    return max(8, block)


@functools.partial(jax.jit, static_argnames=("eps",))
def llama_rms_norm(hidden_states, weight, eps=1e-6):
    """RMSNorm over the last dim, matching LlamaRMSNorm.forward."""
    orig_shape = hidden_states.shape
    hidden = orig_shape[-1]
    rows = int(math.prod(orig_shape[:-1])) if len(orig_shape) > 1 else 1

    input_dtype = hidden_states.dtype
    # PyTorch: weight * x.to(input_dtype) promotes (e.g. f32 weight * bf16 x -> f32).
    out_dtype = jnp.result_type(weight.dtype, input_dtype)

    x2d = hidden_states.reshape(rows, hidden)
    # Hoist the weight cast out of the kernel (no per-step VPU cast).
    w2d = weight.reshape(1, hidden).astype(out_dtype)

    vmem_limit = _vmem_limit_bytes()
    block_rows = _pick_block_rows(
        rows, hidden,
        jnp.dtype(input_dtype).itemsize,
        jnp.dtype(out_dtype).itemsize,
        vmem_limit,
    )
    grid = (pl.cdiv(rows, block_rows),)  # ragged last block is fine (per-row math)

    out = pl.pallas_call(
        functools.partial(_rmsnorm_kernel, eps=eps, input_dtype=input_dtype),
        out_shape=jax.ShapeDtypeStruct((rows, hidden), out_dtype),
        grid_spec=pltpu.PrefetchScalarGridSpec(
            num_scalar_prefetch=0,
            grid=grid,
            in_specs=[
                # Row tiles of the input, streamed along the grid.
                pl.BlockSpec((block_rows, hidden), lambda i: (i, 0)),
                # Small weight row: constant index_map keeps it resident.
                pl.BlockSpec((1, hidden), lambda i: (0, 0)),
            ],
            out_specs=pl.BlockSpec((block_rows, hidden), lambda i: (i, 0)),
        ),
        compiler_params=pltpu.CompilerParams(
            dimension_semantics=("parallel",),
            vmem_limit_bytes=vmem_limit,
        ),
    )(x2d, w2d)

    return out.reshape(orig_shape[:-1] + (hidden,))


def _reference(x, weight, eps):
    """Plain-JAX reference mirroring the PyTorch module (incl. dtype promotion)."""
    x32 = x.astype(jnp.float32)
    var = jnp.mean(x32 * x32, axis=-1, keepdims=True)
    return weight * (x32 * jax.lax.rsqrt(var + eps)).astype(x.dtype)


if __name__ == "__main__":
    key = jax.random.PRNGKey(0)
    eps = 1e-6

    # Case 1: small shape consistent with the module (batch=2, seq=8, hidden=32),
    # f32 activations + f32 weight.  rows=16 -> block_rows=8 -> grid=(2,).
    batch, seq, hidden = 2, 8, 32
    k1, k2 = jax.random.split(key)
    x = jax.random.normal(k1, (batch, seq, hidden), dtype=jnp.float32)
    weight = jnp.ones((hidden,), dtype=jnp.float32)

    out = jax.block_until_ready(llama_rms_norm(x, weight, eps=eps))
    ref = _reference(x, weight, eps)
    assert out.shape == x.shape and out.dtype == ref.dtype
    assert jnp.allclose(out, ref, atol=1e-5, rtol=1e-5)

    # Case 2: ragged row count (rows=15 not a multiple of block_rows=8) to
    # exercise the cdiv grid / masked last block.
    x2 = jax.random.normal(k2, (3, 5, hidden), dtype=jnp.float32)
    out2 = jax.block_until_ready(llama_rms_norm(x2, weight, eps=eps))
    ref2 = _reference(x2, weight, eps)
    assert jnp.allclose(out2, ref2, atol=1e-5, rtol=1e-5)

    # Case 3: bf16 activations with f32 weight -> output promotes to f32
    # (matches torch's `weight * hidden_states.to(input_dtype)` promotion).
    xb = x.astype(jnp.bfloat16)
    out3 = jax.block_until_ready(llama_rms_norm(xb, weight, eps=eps))
    ref3 = _reference(xb, weight, eps)
    assert out3.dtype == jnp.float32
    assert jnp.allclose(out3, ref3, atol=1e-2, rtol=1e-2)

    print("KERNEL_OK")
</pallas_src>

<mosaic_0001>
module attributes {stable_mosaic.version = 11 : i64} {
  func.func @_rmsnorm_kernel(%arg0: i32, %arg1: memref<8x32xf32, #tpu.memory_space<vmem>>, %arg2: memref<1x32xf32, #tpu.memory_space<vmem>>, %arg3: memref<8x32xf32, #tpu.memory_space<vmem>>) attributes {dimension_semantics = [#tpu.dimension_semantics<parallel>], iteration_bounds = array<i64: 2>, scalar_prefetch = 0 : i64, scratch_operands = 0 : i64, tpu.core_type = #tpu.core_type<tc>, window_params = [{transform_indices = @transform_0, window_bounds = array<i64: 8, 32>}, {pipeline_mode = #tpu.pipeline_mode<synchronous>, transform_indices = @transform_1, window_bounds = array<i64: 1, 32>}, {transform_indices = @transform_2, window_bounds = array<i64: 8, 32>}]} {
    %c0 = arith.constant 0 : index
    %c0_0 = arith.constant 0 : index
    %0 = vector.load %arg1[%c0, %c0_0] : memref<8x32xf32, #tpu.memory_space<vmem>>, vector<8x32xf32>
    %1 = arith.mulf %0, %0 : vector<8x32xf32>
    %cst = arith.constant dense<0.000000e+00> : vector<8xf32>
    %2 = vector.multi_reduction <add>, %1, %cst [1] : vector<8x32xf32> to vector<8xf32>
    %3 = vector.shape_cast %2 : vector<8xf32> to vector<8x1xf32>
    %cst_1 = arith.constant 3.200000e+01 : f32
    %4 = vector.broadcast %cst_1 : f32 to vector<8x1xf32>
    %5 = arith.divf %3, %4 : vector<8x1xf32>
    %cst_2 = arith.constant 9.99999997E-7 : f32
    %6 = vector.broadcast %cst_2 : f32 to vector<8x1xf32>
    %7 = arith.addf %5, %6 : vector<8x1xf32>
    %8 = math.rsqrt %7 : vector<8x1xf32>
    %9 = vector.broadcast %8 : vector<8x1xf32> to vector<8x32xf32>
    %10 = arith.mulf %0, %9 : vector<8x32xf32>
    %c0_3 = arith.constant 0 : index
    %c0_4 = arith.constant 0 : index
    %11 = vector.load %arg2[%c0_3, %c0_4] : memref<1x32xf32, #tpu.memory_space<vmem>>, vector<1x32xf32>
    %12 = vector.broadcast %11 : vector<1x32xf32> to vector<8x32xf32>
    %13 = arith.mulf %12, %10 : vector<8x32xf32>
    %c0_5 = arith.constant 0 : index
    %c0_6 = arith.constant 0 : index
    %14 = vector.load %arg3[%c0_5, %c0_6] : memref<8x32xf32, #tpu.memory_space<vmem>>, vector<8x32xf32>
    tpu.vector_store %arg3[%c0_5, %c0_6], %13 {strides = array<i32>} : memref<8x32xf32, #tpu.memory_space<vmem>>, vector<8x32xf32>,
    return
  }
  func.func @transform_0(%arg0: i32) -> (i32, i32) {
    %c0_i32 = arith.constant 0 : i32
    %c0_i32_0 = arith.constant 0 : i32
    return %arg0, %c0_i32 : i32, i32
  }
  func.func @transform_1(%arg0: i32) -> (i32, i32) {
    %c0_i32 = arith.constant 0 : i32
    %c0_i32_0 = arith.constant 0 : i32
    %c0_i32_1 = arith.constant 0 : i32
    return %c0_i32, %c0_i32_0 : i32, i32
  }
  func.func @transform_2(%arg0: i32) -> (i32, i32) {
    %c0_i32 = arith.constant 0 : i32
    %c0_i32_0 = arith.constant 0 : i32
    return %arg0, %c0_i32 : i32, i32
  }
}

</mosaic_0001>

<llo_original>
// kernel: llama_rms_norm.1
$region0: #{llama_rms_norm.1}
  #allocation0 [shape = 'u32[]', space=smem, size = 0x4, offset = 0x4, fixed_abs, tag = 'smem constant byte address 0x4 - core index']
  #allocation1 [shape = 'u32[72,128]{1,0:T(1,128)}', space=vmem, size = 0x9000, scoped, tag = 'internal scratch']
  %s0 = inlined_call_operand.hbm [shape: f32[16,32], index: 0, kind: input, shape index: {}]
  %s1 = inlined_call_operand.vmem [shape: f32[1,32], index: 1, kind: input, shape index: {}]
  %s2 = inlined_call_operand.hbm [shape: f32[16,32], index: 2, kind: output, shape index: {}]
  %s3 = sld [smem:[#allocation0]]
  $region45: #{llama_rms_norm.1} parent=0
    _
  %s5 = ssub.s32 1, %s3
  %s6 = scalar_select 0, %s5, %s3
  $region1: #{llama_rms_norm.1} parent=0
    #allocation2 [shape = 'u8[8192]{0}', space=vmem, size = 0x2000, scoped, tag = 'input window, operand 0']
    #allocation3 [shape = 's32[2]{0}', space=sflag, size = 0x8, scoped, tag = 'scoped memory for llama_rms_norm.1']
    #allocation4 [shape = 's32[2]{0}', space=sflag, size = 0x8, scoped, tag = 'scoped memory for llama_rms_norm.1']
    #allocation5 [shape = 'u8[8192]{0}', space=vmem, size = 0x2000, scoped, tag = 'output window, operand 0']
    %7 = vsyncpa [#allocation3], 0
    %s8 = scalar_lea.sflag [#allocation3], 1
    %9 = vsyncpa %s8, 0
    %10 = vsyncpa [#allocation4], 0
    %s11 = scalar_lea.sflag [#allocation4], 1
    %12 = vsyncpa %s11, 0
    loop: start=0, step=1, limit=4
    $region2: #{llama_rms_norm.1} parent=1 // loop_pre_header
      _
    $region3: #{llama_rms_norm.1} parent=1 // loop_header
      %s14 = sphi 0, %s18
      %p15 = scmp.ge.s32.totalorder %s14, 4
      %s24 = sphi 0, %s26
      %s27 = sphi 0, %s24
      %s28 = sphi 0, %s27
      %s44 = sphi 0, %s28
      %s48 = sphi 0, %s48
      %s50 = sphi 0, %s48
      %s51 = sphi 0, %s50
      %s65 = sphi 0, %s51
      %s71 = sphi 0, %s73
      %s74 = sphi 0, %s71
      %s75 = sphi 0, %s74
      %s91 = sphi 0, %s75
    $region4: #{llama_rms_norm.1} parent=1 // loop_header_branch
      %17 = sbr.rel (%p15) target = $region8
    $region5: #{llama_rms_norm.1} parent=1 // loop_body
      %s19 = ssub.s32 %s14, 1
      %s20 = ssub.s32 %s14, 2
      %s21 = sadd.s32 %s14, 1
      %s22 = ssub.s32 %s14, %s21
      %p23 = scmp.eq.s32.totalorder %s22, 0
      %s25 = sadd.s32 %s24, 1
      %s26 = scalar_select %p23, %s24, %s25
      %p29 = pneg %p23
      %p30 = scmp.eq.s32.totalorder %s14, 1
      %p31 = por %p29, %p30
      %p32 = scmp.ne.s32.totalorder %s24, %s27
      %p33 = scmp.eq.s32.totalorder %s14, 0
      %p34 = por %p32, %p33
      %p35 = scmp.ne.s32.totalorder %s24, %s27
      %p36 = scmp.eq.s32.totalorder %s19, 1
      %p37 = por %p35, %p36
      %p38 = scmp.ne.s32.totalorder %s27, %s28
      %p39 = scmp.eq.s32.totalorder %s19, 0
      %p40 = por %p38, %p39
      %p41 = scmp.ne.s32.totalorder %s27, %s28
      %p42 = scmp.eq.s32.totalorder %s20, 1
      %p43 = por %p41, %p42
      %p45 = scmp.ne.s32.totalorder %s28, %s44
      %p46 = scmp.eq.s32.totalorder %s20, 0
      %p47 = por %p45, %p46
      %s49 = sadd.s32 %s48, 1
      %p52 = scmp.eq.s32.totalorder %s14, 1
      %p53 = scmp.ne.s32.totalorder %s48, %s50
      %p54 = scmp.eq.s32.totalorder %s14, 0
      %p55 = por %p53, %p54
      %p56 = scmp.ne.s32.totalorder %s48, %s50
      %p57 = scmp.eq.s32.totalorder %s19, 1
      %p58 = por %p56, %p57
      %p59 = scmp.ne.s32.totalorder %s50, %s51
      %p60 = scmp.eq.s32.totalorder %s19, 0
      %p61 = por %p59, %p60
      %p62 = scmp.ne.s32.totalorder %s50, %s51
      %p63 = scmp.eq.s32.totalorder %s20, 1
      %p64 = por %p62, %p63
      %p66 = scmp.ne.s32.totalorder %s51, %s65
      %p67 = scmp.eq.s32.totalorder %s20, 0
      %p68 = por %p66, %p67
      %s69 = ssub.s32 %s14, %s21
      %p70 = scmp.eq.s32.totalorder %s69, 0
      %s72 = sadd.s32 %s71, 1
      %s73 = scalar_select %p70, %s71, %s72
      %p76 = pneg %p70
      %p77 = scmp.eq.s32.totalorder %s14, 1
      %p78 = por %p76, %p77
      %p79 = scmp.ne.s32.totalorder %s71, %s74
      %p80 = scmp.eq.s32.totalorder %s14, 0
      %p81 = por %p79, %p80
      %p82 = scmp.ne.s32.totalorder %s71, %s74
      %p83 = scmp.eq.s32.totalorder %s19, 1
      %p84 = por %p82, %p83
      %p85 = scmp.ne.s32.totalorder %s74, %s75
      %p86 = scmp.eq.s32.totalorder %s19, 0
      %p87 = por %p85, %p86
      %p88 = scmp.ne.s32.totalorder %s74, %s75
      %p89 = scmp.eq.s32.totalorder %s20, 1
      %p90 = por %p88, %p89
      %p92 = scmp.ne.s32.totalorder %s75, %s91
      %p93 = scmp.eq.s32.totalorder %s20, 0
      %p94 = por %p92, %p93
      %p95 = scmp.le.s32.totalorder 1, %s14
      %p96 = scmp.lt.s32.totalorder %s14, 3
      %p97 = pnand %p95, %p96
      %p98 = pneg %p97
      // Predicated region
      $region9: #{llama_rms_norm.1} parent=5 // pred_check
        _
      $region10: #{llama_rms_norm.1} parent=5 // pred_check_branch
        %100 = sbr.rel (%p97) target = $region12
      $region11: #{llama_rms_norm.1} parent=5 // pred_region
        %s101 = ssub.s32 %s14, 1
        // Predicated region
        $region13: #{llama_rms_norm.1} parent=11 // pred_check
          %p102 = pneg %p61
        $region14: #{llama_rms_norm.1} parent=11 // pred_check_branch
          %104 = sbr.rel (%p102) target = $region16
        $region15: #{llama_rms_norm.1} parent=11 // pred_region
          _
        $region16: #{llama_rms_norm.1} parent=11 // pred_fallthru
          _
      $region12: #{llama_rms_norm.1} parent=5 // pred_fallthru
        _
      %p105 = scmp.lt.s32.totalorder %s14, 2
      // Predicated region
      $region17: #{llama_rms_norm.1} parent=5 // pred_check
        %p106 = pneg %p105
      $region18: #{llama_rms_norm.1} parent=5 // pred_check_branch
        %108 = sbr.rel (%p106) target = $region20
      $region19: #{llama_rms_norm.1} parent=5 // pred_region
        // Predicated region
        $region21: #{llama_rms_norm.1} parent=19 // pred_check
          %p109 = pneg %p34
        $region22: #{llama_rms_norm.1} parent=19 // pred_check_branch
          %111 = sbr.rel (%p109) target = $region24
        $region23: #{llama_rms_norm.1} parent=19 // pred_region
          %s112 = sand.u32 %s24, 1
          %s113 = scalar_lea.sflag [#allocation3], %s112
          %s114 = sand.u32 %s24, 1
          %s115 = smul.addr %s114, 8
          %s116 = scalar_lea.vmem [#allocation2], %s115
          %118 = vsyncadd %s113, 0
          %s119 = smul.addr %s14, 8
          %s120 = scalar_lea.hbm %s0, %s119
          %s122 = sshll.u32 %s120, 4
          %s123 = int_to_ptr.hbm [resolvable:$true] %s122
          %s124 = sshll.u32 %s116, 4
          %s125 = int_to_ptr.vmem [resolvable:$true] %s124
          %127 = dma.hbm_to_vmem [thread:$0]  %s123, 128, %s125, %s113
        $region24: #{llama_rms_norm.1} parent=19 // pred_fallthru
          _
      $region20: #{llama_rms_norm.1} parent=5 // pred_fallthru
        _
      %p128 = scmp.le.s32.totalorder 1, %s14
      %p129 = scmp.lt.s32.totalorder %s14, 3
      %p130 = pnand %p128, %p129
      %p131 = pneg %p130
      // Predicated region
      $region25: #{llama_rms_norm.1} parent=5 // pred_check
        _
      $region26: #{llama_rms_norm.1} parent=5 // pred_check_branch
        %133 = sbr.rel (%p130) target = $region28
      $region27: #{llama_rms_norm.1} parent=5 // pred_region
        %s134 = ssub.s32 %s14, 1
        %s135 = sand.u32 %s27, 1
        %s136 = scalar_lea.sflag [#allocation3], %s135
        %s137 = sand.u32 %s27, 1
        %s138 = smul.addr %s137, 8
        %s139 = scalar_lea.vmem [#allocation2], %s138
        // Predicated region
        $region29: #{llama_rms_norm.1} parent=27 // pred_check
          %p140 = pneg %p40
        $region30: #{llama_rms_norm.1} parent=27 // pred_check_branch
          %142 = sbr.rel (%p140) target = $region32
        $region31: #{llama_rms_norm.1} parent=27 // pred_region
          %144 = dma.done %s136, 128
        $region32: #{llama_rms_norm.1} parent=27 // pred_fallthru
          _
        %s145 = sand.u32 %s27, 1
        %s146 = scalar_lea.sflag [#allocation3], %s145
        %s147 = sand.u32 %s27, 1
        %s148 = smul.addr %s147, 8
        %s149 = scalar_lea.vmem [#allocation2], %s148
        %p150 = pneg %p40
        %p151 = pneg %p37
        %p152 = pneg %p61
        %p153 = pneg %p58
        %p154 = pneg %p87
        %p155 = pneg %p84
        %s156 = sand.u32 %s74, 1
        %s157 = scalar_lea.sflag [#allocation4], %s156
        %s158 = sand.u32 %s74, 1
        %s159 = smul.addr %s158, 8
        %s160 = scalar_lea.vmem [#allocation5], %s159
        %v161 = vld [vmem:[%s139] sm:$0xff]
        %v162 = vmul.f32 %v161, %v161
        %vm163 = vcmask 261120
        %v164 = vsel %vm163, %v162, 0.0
        %165 = vadd.xlane.f32.xlu0 %v164
        %v166 = vpop.xlane.xlu0 %165
        %v167 = vrcp.pop 32.0
        %v168 = vmul.f32 32.0, %v167
        %v169 = vsub.f32 1.0, %v168
        %v170 = vmul.f32 %v167, %v169
        %v171 = vadd.f32 %v167, %v170
        %vm172 = vweird.f32 %v167
        %v173 = vsel %vm172, %v167, %v171
        %v174 = vmul.f32 %v166, %v173
        %v175 = vadd.f32 %v174, 1e-06
        %v176 = vrsqrt.pop %v175
        %v177 = vmul.f32 %v176, %v175
        %v178 = vmul.f32 %v177, %v176
        %v179 = vmul.f32 0.5, %v178
        %v180 = vsub.f32 1.5, %v179
        %v181 = vmul.f32 %v176, %v180
        %vm182 = vweird.f32 %v175
        %vm183 = vweird.f32 %v176
        %vm184 = vmor %vm182, %vm183
        %v185 = vsel %vm184, %v176, %v181
        %v186 = vmul.f32 %v161, %v185
        %v187 = vld [vmem:[%s1] sm:$0x1]
        %v189 = vperm.slane %v187, 0
        %v191 = vmul.f32 %v189, %v186
        %192 = vst.msk [vmem:[%s160] sm:$0xff] %vm163, %v191
        %s193 = sand.u32 %s74, 1
        %s194 = scalar_lea.sflag [#allocation4], %s193
        %s195 = sand.u32 %s74, 1
        %s196 = smul.addr %s195, 8
        %s197 = scalar_lea.vmem [#allocation5], %s196
        // Predicated region
        $region33: #{llama_rms_norm.1} parent=27 // pred_check
          %p198 = pneg %p84
        $region34: #{llama_rms_norm.1} parent=27 // pred_check_branch
          %200 = sbr.rel (%p198) target = $region36
        $region35: #{llama_rms_norm.1} parent=27 // pred_region
          %202 = vsyncadd %s194, 0
          %s203 = smul.addr %s19, 8
          %s204 = scalar_lea.hbm %s2, %s203
          %s206 = sshll.u32 %s197, 4
          %s207 = int_to_ptr.vmem [resolvable:$true] %s206
          %s208 = sshll.u32 %s204, 4
          %s209 = int_to_ptr.hbm [resolvable:$true] %s208
          %211 = dma.vmem_to_hbm [thread:$0]  %s207, 128, %s209, %s194
        $region36: #{llama_rms_norm.1} parent=27 // pred_fallthru
          _
      $region28: #{llama_rms_norm.1} parent=5 // pred_fallthru
        _
      %p212 = scmp.le.s32.totalorder 2, %s14
      // Predicated region
      $region37: #{llama_rms_norm.1} parent=5 // pred_check
        %p213 = pneg %p212
      $region38: #{llama_rms_norm.1} parent=5 // pred_check_branch
        %215 = sbr.rel (%p213) target = $region40
      $region39: #{llama_rms_norm.1} parent=5 // pred_region
        %s216 = ssub.s32 %s14, 2
        // Predicated region
        $region41: #{llama_rms_norm.1} parent=39 // pred_check
          %p217 = pneg %p90
        $region42: #{llama_rms_norm.1} parent=39 // pred_check_branch
          %219 = sbr.rel (%p217) target = $region44
        $region43: #{llama_rms_norm.1} parent=39 // pred_region
          %s220 = sand.u32 %s75, 1
          %s221 = scalar_lea.sflag [#allocation4], %s220
          %s222 = sand.u32 %s75, 1
          %s223 = smul.addr %s222, 8
          %s224 = scalar_lea.vmem [#allocation5], %s223
          %226 = dma.done %s221, 128
        $region44: #{llama_rms_norm.1} parent=39 // pred_fallthru
          _
      $region40: #{llama_rms_norm.1} parent=5 // pred_fallthru
        _
    $region6: #{llama_rms_norm.1} parent=1 // loop_footer
      %s18 = sadd.s32 1, %s14
    $region7: #{llama_rms_norm.1} parent=1 // loop_footer_branch
      %13 = sbr.rel target = $region3
    $region8: #{llama_rms_norm.1} parent=1 // loop_exit
      _
    %227 = vsyncpa [#allocation3], 1
    %s228 = scalar_lea.sflag [#allocation3], 1
    %229 = vsyncpa %s228, 1
    %230 = vsyncpa [#allocation4], 1
    %s231 = scalar_lea.sflag [#allocation4], 1
    %232 = vsyncpa %s231, 1

</llo_original>
